<compile_context>
chip_gen: v7x
topology: tpu7x:2x2x1
jax: 0.10.0
libtpu: 0.0.40
codegen_flags: <defaults>
</compile_context>

<pallas_src>
import functools

import jax
import jax.numpy as jnp
from jax.experimental import pallas as pl
from jax.experimental.pallas import tpu as pltpu

_LANE = 128          # TPU lane width (last-dim vreg width)
_SUBLANE = 8         # f32 sublane width
_NEG_BIG = -1e30     # bias for padded logit columns -> exp underflows to 0


def _round_up(x, m):
    return (x + m - 1) // m * m


def _pick_tm(batch, k, n_pad, vmem_budget_bytes=24 * 1024 * 1024):
    """Largest batch tile (multiple of 8) whose double-buffered working set fits VMEM."""
    tm = 512
    while tm > _SUBLANE:
        need = (
            2 * tm * k * 4            # x tile, double-buffered
            + 2 * k * n_pad * 4       # weight (constant block, still 2 buffers)
            + 2 * 2 * tm * n_pad * 4  # two outputs, double-buffered
            + 2 * n_pad * 4           # bias
        )
        if need <= vmem_budget_bytes:
            break
        tm //= 2
    return max(_SUBLANE, min(tm, _round_up(batch, _SUBLANE)))


def _fc_softmax_kernel(x_ref, wt_ref, b_ref, logits_ref, preds_ref):
    # x_ref:      (TM, K)      flattened-input tile
    # wt_ref:     (K, N_pad)   fc1 weight, pre-transposed + lane-padded
    # b_ref:      (1, N_pad)   fc1 bias, padded columns = -1e30
    # logits_ref: (TM, N_pad)
    # preds_ref:  (TM, N_pad)
    logits = (
        jnp.dot(x_ref[...], wt_ref[...], preferred_element_type=jnp.float32)
        + b_ref[...]
    )
    logits_ref[...] = logits.astype(logits_ref.dtype)

    # Numerically stable softmax along the lane axis.  Padded columns carry a
    # -1e30 bias, so exp(pad - m) underflows to exactly 0 and they contribute
    # nothing to the denominator.
    m = jnp.max(logits, axis=-1, keepdims=True)
    e = jnp.exp(logits - m)
    denom = jnp.sum(e, axis=-1, keepdims=True)
    preds_ref[...] = (e * pl.reciprocal(denom, approx=False)).astype(preds_ref.dtype)


def prepare_params(weight, bias):
    """One-time param prep: transpose to (K, N) and pad N up to a lane multiple.

    weight: (num_classes, in_features) f32   bias: (num_classes,) f32
    Returns w_pad (K, N_pad), b_pad (1, N_pad).
    """
    n, k = weight.shape
    n_pad = _round_up(n, _LANE)
    w_pad = jnp.zeros((k, n_pad), jnp.float32).at[:, :n].set(weight.T)
    b_pad = jnp.full((1, n_pad), _NEG_BIG, jnp.float32).at[0, :n].set(bias)
    return w_pad, b_pad


@functools.partial(jax.jit, static_argnames=("num_classes",))
def linear_classifier_forward(x_nchw, w_pad, b_pad, *, num_classes):
    """x_nchw: (B, C, H, W) f32; w_pad: (K, N_pad); b_pad: (1, N_pad)."""
    b = x_nchw.shape[0]
    k, n_pad = w_pad.shape

    # Flatten exactly like nn.Flatten (row-major over C, H, W).
    x_flat = x_nchw.reshape(b, k)

    tm = _pick_tm(b, k, n_pad)
    b_rows = _round_up(b, tm)
    if b_rows != b:
        x_flat = jnp.pad(x_flat, ((0, b_rows - b), (0, 0)))
    grid = (b_rows // tm,)

    cost = pl.CostEstimate(
        flops=2 * b_rows * k * n_pad,
        transcendentals=b_rows * n_pad,
        bytes_accessed=4 * (b_rows * k + k * n_pad + n_pad + 2 * b_rows * n_pad),
    )

    logits_p, preds_p = pl.pallas_call(
        _fc_softmax_kernel,
        out_shape=(
            jax.ShapeDtypeStruct((b_rows, n_pad), jnp.float32),  # logits
            jax.ShapeDtypeStruct((b_rows, n_pad), jnp.float32),  # softmax preds
        ),
        grid=grid,
        in_specs=[
            pl.BlockSpec((tm, k), lambda i: (i, 0)),       # x tile marches over batch
            pl.BlockSpec((k, n_pad), lambda i: (0, 0)),    # weight resident
            pl.BlockSpec((1, n_pad), lambda i: (0, 0)),    # bias resident
        ],
        out_specs=(
            pl.BlockSpec((tm, n_pad), lambda i: (i, 0)),
            pl.BlockSpec((tm, n_pad), lambda i: (i, 0)),
        ),
        compiler_params=pltpu.CompilerParams(
            dimension_semantics=("parallel",),  # independent batch tiles
        ),
        cost_estimate=cost,
    )(x_flat, w_pad, b_pad)

    # Strip batch padding and lane padding back to the logical shape.
    return logits_p[:b, :num_classes], preds_p[:b, :num_classes]


def init_params(key, num_classes, num_channels_in, spatial_size):
    """Deterministic init matching the PyTorch module's initialize()."""
    in_features = num_channels_in * spatial_size * spatial_size
    std_val = jnp.sqrt(2.0 / num_classes)  # np.sqrt(2.0 / fout)
    weight = std_val * jax.random.normal(
        key, (num_classes, in_features), dtype=jnp.float32
    )
    bias = jnp.zeros((num_classes,), dtype=jnp.float32)
    return weight, bias


if __name__ == "__main__":
    # Small shapes consistent with the module's forward:
    # batch=2, channels=4, spatial=16, 10 classes  ->  in_features = 1024.
    num_classes = 10
    num_channels_in = 4
    spatial_size = 16
    batch = 2

    key = jax.random.PRNGKey(0)
    k_x, k_w = jax.random.split(key)

    x = jax.random.normal(
        k_x, (batch, num_channels_in, spatial_size, spatial_size), dtype=jnp.float32
    )
    weight, bias = init_params(k_w, num_classes, num_channels_in, spatial_size)

    # One-time parameter layout prep (replaces the old per-call weight.T).
    w_pad, b_pad = prepare_params(weight, bias)

    logits, preds = linear_classifier_forward(
        x, w_pad, b_pad, num_classes=num_classes
    )
    jax.block_until_ready((logits, preds))

    # Sanity check against plain-JAX reference.
    ref_logits = x.reshape(batch, -1) @ weight.T + bias
    ref_preds = jax.nn.softmax(ref_logits, axis=-1)
    assert logits.shape == (batch, num_classes)
    assert preds.shape == (batch, num_classes)
    assert jnp.allclose(logits, ref_logits, atol=1e-5, rtol=1e-5)
    assert jnp.allclose(preds, ref_preds, atol=1e-5, rtol=1e-5)
    assert jnp.allclose(jnp.sum(preds, axis=-1), 1.0, atol=1e-5)

    print("KERNEL_OK")
</pallas_src>

<mosaic_0001>
module attributes {stable_mosaic.version = 11 : i64} {
  func.func @_fc_softmax_kernel(%arg0: i32, %arg1: memref<8x1024xf32, #tpu.memory_space<vmem>>, %arg2: memref<1024x128xf32, #tpu.memory_space<vmem>>, %arg3: memref<1x128xf32, #tpu.memory_space<vmem>>, %arg4: memref<8x128xf32, #tpu.memory_space<vmem>>, %arg5: memref<8x128xf32, #tpu.memory_space<vmem>>) attributes {dimension_semantics = [#tpu.dimension_semantics<parallel>], iteration_bounds = array<i64: 1>, scalar_prefetch = 0 : i64, scratch_operands = 0 : i64, tpu.core_type = #tpu.core_type<tc>, window_params = [{transform_indices = @transform_0, window_bounds = array<i64: 8, 1024>}, {pipeline_mode = #tpu.pipeline_mode<synchronous>, transform_indices = @transform_1, window_bounds = array<i64: 1024, 128>}, {pipeline_mode = #tpu.pipeline_mode<synchronous>, transform_indices = @transform_2, window_bounds = array<i64: 1, 128>}, {transform_indices = @transform_3, window_bounds = array<i64: 8, 128>}, {transform_indices = @transform_4, window_bounds = array<i64: 8, 128>}]} {
    %c0 = arith.constant 0 : index
    %c0_0 = arith.constant 0 : index
    %0 = vector.load %arg1[%c0, %c0_0] : memref<8x1024xf32, #tpu.memory_space<vmem>>, vector<8x1024xf32>
    %c0_1 = arith.constant 0 : index
    %c0_2 = arith.constant 0 : index
    %1 = vector.load %arg2[%c0_1, %c0_2] : memref<1024x128xf32, #tpu.memory_space<vmem>>, vector<1024x128xf32>
    %cst = arith.constant dense<0.000000e+00> : vector<8x128xf32>
    %2 = tpu.matmul %0, %1, %cst {dimension_numbers = #tpu.dot_dimension_numbers<[1], [0], [0], [1], [0, 0, 1, 1], [], []>} : vector<8x1024xf32>, vector<1024x128xf32>, vector<8x128xf32> -> vector<8x128xf32>
    %c0_3 = arith.constant 0 : index
    %c0_4 = arith.constant 0 : index
    %3 = vector.load %arg3[%c0_3, %c0_4] : memref<1x128xf32, #tpu.memory_space<vmem>>, vector<1x128xf32>
    %4 = vector.broadcast %3 : vector<1x128xf32> to vector<8x128xf32>
    %5 = arith.addf %2, %4 : vector<8x128xf32>
    %c0_5 = arith.constant 0 : index
    %c0_6 = arith.constant 0 : index
    %6 = vector.load %arg4[%c0_5, %c0_6] : memref<8x128xf32, #tpu.memory_space<vmem>>, vector<8x128xf32>
    tpu.vector_store %arg4[%c0_5, %c0_6], %5 {strides = array<i32>} : memref<8x128xf32, #tpu.memory_space<vmem>>, vector<8x128xf32>,
    %cst_7 = arith.constant dense<0xFF800000> : vector<8xf32>
    %7 = vector.multi_reduction <maximumf>, %5, %cst_7 [1] : vector<8x128xf32> to vector<8xf32>
    %8 = vector.shape_cast %7 : vector<8xf32> to vector<8x1xf32>
    %9 = vector.broadcast %8 : vector<8x1xf32> to vector<8x128xf32>
    %10 = arith.subf %5, %9 : vector<8x128xf32>
    %11 = math.exp %10 : vector<8x128xf32>
    %cst_8 = arith.constant dense<0.000000e+00> : vector<8xf32>
    %12 = vector.multi_reduction <add>, %11, %cst_8 [1] : vector<8x128xf32> to vector<8xf32>
    %13 = vector.shape_cast %12 : vector<8xf32> to vector<8x1xf32>
    %14 = tpu.reciprocal %13 : vector<8x1xf32> -> vector<8x1xf32>
    %15 = vector.broadcast %14 : vector<8x1xf32> to vector<8x128xf32>
    %16 = arith.mulf %11, %15 : vector<8x128xf32>
    %c0_9 = arith.constant 0 : index
    %c0_10 = arith.constant 0 : index
    %17 = vector.load %arg5[%c0_9, %c0_10] : memref<8x128xf32, #tpu.memory_space<vmem>>, vector<8x128xf32>
    tpu.vector_store %arg5[%c0_9, %c0_10], %16 {strides = array<i32>} : memref<8x128xf32, #tpu.memory_space<vmem>>, vector<8x128xf32>,
    return
  }
  func.func @transform_0(%arg0: i32) -> (i32, i32) {
    %c0_i32 = arith.constant 0 : i32
    %c0_i32_0 = arith.constant 0 : i32
    return %arg0, %c0_i32 : i32, i32
  }
  func.func @transform_1(%arg0: i32) -> (i32, i32) {
    %c0_i32 = arith.constant 0 : i32
    %c0_i32_0 = arith.constant 0 : i32
    %c0_i32_1 = arith.constant 0 : i32
    return %c0_i32, %c0_i32_0 : i32, i32
  }
  func.func @transform_2(%arg0: i32) -> (i32, i32) {
    %c0_i32 = arith.constant 0 : i32
    %c0_i32_0 = arith.constant 0 : i32
    %c0_i32_1 = arith.constant 0 : i32
    return %c0_i32, %c0_i32_0 : i32, i32
  }
  func.func @transform_3(%arg0: i32) -> (i32, i32) {
    %c0_i32 = arith.constant 0 : i32
    %c0_i32_0 = arith.constant 0 : i32
    return %arg0, %c0_i32 : i32, i32
  }
  func.func @transform_4(%arg0: i32) -> (i32, i32) {
    %c0_i32 = arith.constant 0 : i32
    %c0_i32_0 = arith.constant 0 : i32
    return %arg0, %c0_i32 : i32, i32
  }
}

</mosaic_0001>

<llo_original>
// kernel: linear_classifier_forward.1
$region0: #{linear_classifier_forward.1}
  #allocation0 [shape = 'u32[]', space=smem, size = 0x4, offset = 0x4, fixed_abs, tag = 'smem constant byte address 0x4 - core index']
  #allocation1 [shape = 'u32[144,128]{1,0:T(1,128)}', space=vmem, size = 0x12000, scoped, tag = 'internal scratch']
  %s0 = inlined_call_operand.vmem [shape: f32[8,1024], index: 0, kind: input, shape index: {}]
  %s1 = inlined_call_operand.hbm [shape: f32[1024,128], index: 1, kind: input, shape index: {}]
  %s2 = inlined_call_operand.vmem [shape: f32[1,128], index: 2, kind: input, shape index: {}]
  %s3 = inlined_call_operand.vmem [shape: f32[8,128], index: 3, kind: output, shape index: {0}]
  %s4 = inlined_call_operand.vmem [shape: f32[8,128], index: 4, kind: output, shape index: {1}]
  %5 = xla_tuple %s3, %s4
  %s6 = sld [smem:[#allocation0]]
  $region34: #{linear_classifier_forward.1} parent=0
    _
  %s8 = ssub.s32 1, %s6
  %s9 = scalar_select 0, %s8, %s6
  $region1: #{linear_classifier_forward.1} parent=0
    #allocation2 [shape = 'u8[524288]{0}', space=vmem, size = 0x80000, scoped, tag = 'input window, operand 1, single buffered']
    #allocation3 [shape = 's32[1]{0}', space=sflag, size = 0x4, scoped, tag = 'scoped memory for linear_classifier_forward.1']
    %10 = vsyncpa [#allocation3], 0
    // Predicated region
    $region2: #{linear_classifier_forward.1} parent=1 // pred_check
      _
    $region3: #{linear_classifier_forward.1} parent=1 // pred_check_branch
      %12 = sbr.rel (0) target = $region5
    $region4: #{linear_classifier_forward.1} parent=1 // pred_region
      _
    $region5: #{linear_classifier_forward.1} parent=1 // pred_fallthru
      _
    // Predicated region
    $region6: #{linear_classifier_forward.1} parent=1 // pred_check
      _
    $region7: #{linear_classifier_forward.1} parent=1 // pred_check_branch
      %14 = sbr.rel (0) target = $region9
    $region8: #{linear_classifier_forward.1} parent=1 // pred_region
      %s16 = ssub.s32 16384, 16384
      %17 = vsyncadd [#allocation3], %s16
      %s18 = sshll.u32 [#allocation2], 4
      %s19 = int_to_ptr.vmem [resolvable:$true] %s18
      %24 = dma.hbm_to_vmem [thread:$0]  %s1, 16384, %s19, [#allocation3], 128, 128, 8
    $region9: #{linear_classifier_forward.1} parent=1 // pred_fallthru
      _
    // Predicated region
    $region10: #{linear_classifier_forward.1} parent=1 // pred_check
      _
    $region11: #{linear_classifier_forward.1} parent=1 // pred_check_branch
      %26 = sbr.rel (0) target = $region13
    $region12: #{linear_classifier_forward.1} parent=1 // pred_region
      _
    $region13: #{linear_classifier_forward.1} parent=1 // pred_fallthru
      _
    // Predicated region
    $region14: #{linear_classifier_forward.1} parent=1 // pred_check
      _
    $region15: #{linear_classifier_forward.1} parent=1 // pred_check_branch
      %28 = sbr.rel (0) target = $region17
    $region16: #{linear_classifier_forward.1} parent=1 // pred_region
      %29 = dma.done [#allocation3], 16384
    $region17: #{linear_classifier_forward.1} parent=1 // pred_fallthru
      _
    %v30 = vld [vmem:[%s0] sm:$0xff]
    %v31 = vld [vmem:[%s0 + $0x8] sm:$0xff]
    %v32 = vld [vmem:[%s0 + $0x10] sm:$0xff]
    %v33 = vld [vmem:[%s0 + $0x18] sm:$0xff]
    %v34 = vld [vmem:[%s0 + $0x20] sm:$0xff]
    %v35 = vld [vmem:[%s0 + $0x28] sm:$0xff]
    %v36 = vld [vmem:[%s0 + $0x30] sm:$0xff]
    %v37 = vld [vmem:[%s0 + $0x38] sm:$0xff]
    %v38 = vld [vmem:[#allocation2] sm:$0xff]
    %v39 = vld [vmem:[#allocation2 + $0x8] sm:$0xff]
    %v40 = vld [vmem:[#allocation2 + $0x10] sm:$0xff]
    %v41 = vld [vmem:[#allocation2 + $0x18] sm:$0xff]
    %v42 = vld [vmem:[#allocation2 + $0x20] sm:$0xff]
    %v43 = vld [vmem:[#allocation2 + $0x28] sm:$0xff]
    %v44 = vld [vmem:[#allocation2 + $0x30] sm:$0xff]
    %v45 = vld [vmem:[#allocation2 + $0x38] sm:$0xff]
    %v46 = vld [vmem:[#allocation2 + $0x40] sm:$0xff]
    %v47 = vld [vmem:[#allocation2 + $0x48] sm:$0xff]
    %v48 = vld [vmem:[#allocation2 + $0x50] sm:$0xff]
    %v49 = vld [vmem:[#allocation2 + $0x58] sm:$0xff]
    %v50 = vld [vmem:[#allocation2 + $0x60] sm:$0xff]
    %v51 = vld [vmem:[#allocation2 + $0x68] sm:$0xff]
    %v52 = vld [vmem:[#allocation2 + $0x70] sm:$0xff]
    %v53 = vld [vmem:[#allocation2 + $0x78] sm:$0xff]
    %v54 = vld [vmem:[#allocation2 + $0x80] sm:$0xff]
    %v55 = vld [vmem:[#allocation2 + $0x88] sm:$0xff]
    %v56 = vld [vmem:[#allocation2 + $0x90] sm:$0xff]
    %v57 = vld [vmem:[#allocation2 + $0x98] sm:$0xff]
    %v58 = vld [vmem:[#allocation2 + $0xa0] sm:$0xff]
    %v59 = vld [vmem:[#allocation2 + $0xa8] sm:$0xff]
    %v60 = vld [vmem:[#allocation2 + $0xb0] sm:$0xff]
    %v61 = vld [vmem:[#allocation2 + $0xb8] sm:$0xff]
    %v62 = vld [vmem:[#allocation2 + $0xc0] sm:$0xff]
    %v63 = vld [vmem:[#allocation2 + $0xc8] sm:$0xff]
    %v64 = vld [vmem:[#allocation2 + $0xd0] sm:$0xff]
    %v65 = vld [vmem:[#allocation2 + $0xd8] sm:$0xff]
    %v66 = vld [vmem:[#allocation2 + $0xe0] sm:$0xff]
    %v67 = vld [vmem:[#allocation2 + $0xe8] sm:$0xff]
    %v68 = vld [vmem:[#allocation2 + $0xf0] sm:$0xff]
    %v69 = vld [vmem:[#allocation2 + $0xf8] sm:$0xff]
    %v70 = vld [vmem:[#allocation2 + $0x100] sm:$0xff]
    %v71 = vld [vmem:[#allocation2 + $0x108] sm:$0xff]
    %v72 = vld [vmem:[#allocation2 + $0x110] sm:$0xff]
    %v73 = vld [vmem:[#allocation2 + $0x118] sm:$0xff]
    %v74 = vld [vmem:[#allocation2 + $0x120] sm:$0xff]
    %v75 = vld [vmem:[#allocation2 + $0x128] sm:$0xff]
    %v76 = vld [vmem:[#allocation2 + $0x130] sm:$0xff]
    %v77 = vld [vmem:[#allocation2 + $0x138] sm:$0xff]
    %v78 = vld [vmem:[#allocation2 + $0x140] sm:$0xff]
    %v79 = vld [vmem:[#allocation2 + $0x148] sm:$0xff]
    %v80 = vld [vmem:[#allocation2 + $0x150] sm:$0xff]
    %v81 = vld [vmem:[#allocation2 + $0x158] sm:$0xff]
    %v82 = vld [vmem:[#allocation2 + $0x160] sm:$0xff]
    %v83 = vld [vmem:[#allocation2 + $0x168] sm:$0xff]
    %v84 = vld [vmem:[#allocation2 + $0x170] sm:$0xff]
    %v85 = vld [vmem:[#allocation2 + $0x178] sm:$0xff]
    %v86 = vld [vmem:[#allocation2 + $0x180] sm:$0xff]
    %v87 = vld [vmem:[#allocation2 + $0x188] sm:$0xff]
    %v88 = vld [vmem:[#allocation2 + $0x190] sm:$0xff]
    %v89 = vld [vmem:[#allocation2 + $0x198] sm:$0xff]
    %v90 = vld [vmem:[#allocation2 + $0x1a0] sm:$0xff]
    %v91 = vld [vmem:[#allocation2 + $0x1a8] sm:$0xff]
    %v92 = vld [vmem:[#allocation2 + $0x1b0] sm:$0xff]
    %v93 = vld [vmem:[#allocation2 + $0x1b8] sm:$0xff]
    %v94 = vld [vmem:[#allocation2 + $0x1c0] sm:$0xff]
    %v95 = vld [vmem:[#allocation2 + $0x1c8] sm:$0xff]
    %v96 = vld [vmem:[#allocation2 + $0x1d0] sm:$0xff]
    %v97 = vld [vmem:[#allocation2 + $0x1d8] sm:$0xff]
    %v98 = vld [vmem:[#allocation2 + $0x1e0] sm:$0xff]
    %v99 = vld [vmem:[#allocation2 + $0x1e8] sm:$0xff]
    %v100 = vld [vmem:[#allocation2 + $0x1f0] sm:$0xff]
    %v101 = vld [vmem:[#allocation2 + $0x1f8] sm:$0xff]
    %v102 = vld [vmem:[#allocation2 + $0x200] sm:$0xff]
    %v103 = vld [vmem:[#allocation2 + $0x208] sm:$0xff]
    %v104 = vld [vmem:[#allocation2 + $0x210] sm:$0xff]
    %v105 = vld [vmem:[#allocation2 + $0x218] sm:$0xff]
    %v106 = vld [vmem:[#allocation2 + $0x220] sm:$0xff]
    %v107 = vld [vmem:[#allocation2 + $0x228] sm:$0xff]
    %v108 = vld [vmem:[#allocation2 + $0x230] sm:$0xff]
    %v109 = vld [vmem:[#allocation2 + $0x238] sm:$0xff]
    %v110 = vld [vmem:[#allocation2 + $0x240] sm:$0xff]
    %v111 = vld [vmem:[#allocation2 + $0x248] sm:$0xff]
    %v112 = vld [vmem:[#allocation2 + $0x250] sm:$0xff]
    %v113 = vld [vmem:[#allocation2 + $0x258] sm:$0xff]
    %v114 = vld [vmem:[#allocation2 + $0x260] sm:$0xff]
    %v115 = vld [vmem:[#allocation2 + $0x268] sm:$0xff]
    %v116 = vld [vmem:[#allocation2 + $0x270] sm:$0xff]
    %v117 = vld [vmem:[#allocation2 + $0x278] sm:$0xff]
    %v118 = vld [vmem:[#allocation2 + $0x280] sm:$0xff]
    %v119 = vld [vmem:[#allocation2 + $0x288] sm:$0xff]
    %v120 = vld [vmem:[#allocation2 + $0x290] sm:$0xff]
    %v121 = vld [vmem:[#allocation2 + $0x298] sm:$0xff]
    %v122 = vld [vmem:[#allocation2 + $0x2a0] sm:$0xff]
    %v123 = vld [vmem:[#allocation2 + $0x2a8] sm:$0xff]
    %v124 = vld [vmem:[#allocation2 + $0x2b0] sm:$0xff]
    %v125 = vld [vmem:[#allocation2 + $0x2b8] sm:$0xff]
    %v126 = vld [vmem:[#allocation2 + $0x2c0] sm:$0xff]
    %v127 = vld [vmem:[#allocation2 + $0x2c8] sm:$0xff]
    %v128 = vld [vmem:[#allocation2 + $0x2d0] sm:$0xff]
    %v129 = vld [vmem:[#allocation2 + $0x2d8] sm:$0xff]
    %v130 = vld [vmem:[#allocation2 + $0x2e0] sm:$0xff]
    %v131 = vld [vmem:[#allocation2 + $0x2e8] sm:$0xff]
    %v132 = vld [vmem:[#allocation2 + $0x2f0] sm:$0xff]
    %v133 = vld [vmem:[#allocation2 + $0x2f8] sm:$0xff]
    %v134 = vld [vmem:[#allocation2 + $0x300] sm:$0xff]
    %v135 = vld [vmem:[#allocation2 + $0x308] sm:$0xff]
    %v136 = vld [vmem:[#allocation2 + $0x310] sm:$0xff]
    %v137 = vld [vmem:[#allocation2 + $0x318] sm:$0xff]
    %v138 = vld [vmem:[#allocation2 + $0x320] sm:$0xff]
    %v139 = vld [vmem:[#allocation2 + $0x328] sm:$0xff]
    %v140 = vld [vmem:[#allocation2 + $0x330] sm:$0xff]
    %v141 = vld [vmem:[#allocation2 + $0x338] sm:$0xff]
    %v142 = vld [vmem:[#allocation2 + $0x340] sm:$0xff]
    %v143 = vld [vmem:[#allocation2 + $0x348] sm:$0xff]
    %v144 = vld [vmem:[#allocation2 + $0x350] sm:$0xff]
    %v145 = vld [vmem:[#allocation2 + $0x358] sm:$0xff]
    %v146 = vld [vmem:[#allocation2 + $0x360] sm:$0xff]
    %v147 = vld [vmem:[#allocation2 + $0x368] sm:$0xff]
    %v148 = vld [vmem:[#allocation2 + $0x370] sm:$0xff]
    %v149 = vld [vmem:[#allocation2 + $0x378] sm:$0xff]
    %v150 = vld [vmem:[#allocation2 + $0x380] sm:$0xff]
    %v151 = vld [vmem:[#allocation2 + $0x388] sm:$0xff]
    %v152 = vld [vmem:[#allocation2 + $0x390] sm:$0xff]
    %v153 = vld [vmem:[#allocation2 + $0x398] sm:$0xff]
    %v154 = vld [vmem:[#allocation2 + $0x3a0] sm:$0xff]
    %v155 = vld [vmem:[#allocation2 + $0x3a8] sm:$0xff]
    %v156 = vld [vmem:[#allocation2 + $0x3b0] sm:$0xff]
    %v157 = vld [vmem:[#allocation2 + $0x3b8] sm:$0xff]
    %v158 = vld [vmem:[#allocation2 + $0x3c0] sm:$0xff]
    %v159 = vld [vmem:[#allocation2 + $0x3c8] sm:$0xff]
    %v160 = vld [vmem:[#allocation2 + $0x3d0] sm:$0xff]
    %v161 = vld [vmem:[#allocation2 + $0x3d8] sm:$0xff]
    %v162 = vld [vmem:[#allocation2 + $0x3e0] sm:$0xff]
    %v163 = vld [vmem:[#allocation2 + $0x3e8] sm:$0xff]
    %v164 = vld [vmem:[#allocation2 + $0x3f0] sm:$0xff]
    %v165 = vld [vmem:[#allocation2 + $0x3f8] sm:$0xff]
    %v166 = vld [vmem:[%s2] sm:$0x1]
    %v168 = vlaneseq
    %v169 = vshrl.u32 %v168, 7
    %v170 = vsub.s32 0, %v169
    %v171 = vrot.slane %v166, %v170
    %173 = vmatprep.subr.mxu0 0.0
    %174 = vmatpush1.msra.mxu0 %v38
    %175 = vmatprep.subr.mxu0 0.0
    %176 = vmatpush1.msra.mxu0 %v39
    %177 = vmatprep.subr.mxu0 0.0
    %178 = vmatpush1.msra.mxu0 %v40
    %179 = vmatprep.subr.mxu0 0.0
    %180 = vmatpush1.msra.mxu0 %v41
    %181 = vmatprep.subr.mxu0 0.0
    %182 = vmatpush1.msra.mxu0 %v42
    %183 = vmatprep.subr.mxu0 0.0
    %184 = vmatpush1.msra.mxu0 %v43
    %185 = vmatprep.subr.mxu0 0.0
    %186 = vmatpush1.msra.mxu0 %v44
    %187 = vmatprep.subr.mxu0 0.0
    %188 = vmatpush1.msra.mxu0 %v45
    %189 = vmatprep.subr.mxu0 0.0
    %190 = vmatpush1.msra.mxu0 %v46
    %191 = vmatprep.subr.mxu0 0.0
    %192 = vmatpush1.msra.mxu0 %v47
    %193 = vmatprep.subr.mxu0 0.0
    %194 = vmatpush1.msra.mxu0 %v48
    %195 = vmatprep.subr.mxu0 0.0
    %196 = vmatpush1.msra.mxu0 %v49
    %197 = vmatprep.subr.mxu0 0.0
    %198 = vmatpush1.msra.mxu0 %v50
    %199 = vmatprep.subr.mxu0 0.0
    %200 = vmatpush1.msra.mxu0 %v51
    %201 = vmatprep.subr.mxu0 0.0
    %202 = vmatpush1.msra.mxu0 %v52
    %203 = vmatprep.subr.mxu0 0.0
    %204 = vmatpush1.msra.mxu0 %v53
    %205 = vmatprep.subr.mxu0 0.0
    %206 = vmatpush1.msra.mxu0 %v54
    %207 = vmatprep.subr.mxu0 0.0
    %208 = vmatpush1.msra.mxu0 %v55
    %209 = vmatprep.subr.mxu0 0.0
    %210 = vmatpush1.msra.mxu0 %v56
    %211 = vmatprep.subr.mxu0 0.0
    %212 = vmatpush1.msra.mxu0 %v57
    %213 = vmatprep.subr.mxu0 0.0
    %214 = vmatpush1.msra.mxu0 %v58
    %215 = vmatprep.subr.mxu0 0.0
    %216 = vmatpush1.msra.mxu0 %v59
    %217 = vmatprep.subr.mxu0 0.0
    %218 = vmatpush1.msra.mxu0 %v60
    %219 = vmatprep.subr.mxu0 0.0
    %220 = vmatpush1.msra.mxu0 %v61
    %221 = vmatprep.subr.mxu0 0.0
    %222 = vmatpush1.msra.mxu0 %v62
    %223 = vmatprep.subr.mxu0 0.0
    %224 = vmatpush1.msra.mxu0 %v63
    %225 = vmatprep.subr.mxu0 0.0
    %226 = vmatpush1.msra.mxu0 %v64
    %227 = vmatprep.subr.mxu0 0.0
    %228 = vmatpush1.msra.mxu0 %v65
    %229 = vmatprep.subr.mxu0 0.0
    %230 = vmatpush1.msra.mxu0 %v66
    %231 = vmatprep.subr.mxu0 0.0
    %232 = vmatpush1.msra.mxu0 %v67
    %233 = vmatprep.subr.mxu0 0.0
    %234 = vmatpush1.msra.mxu0 %v68
    %235 = vmatprep.subr.mxu0 0.0
    %236 = vmatpush1.msra.mxu0 %v69
    %237 = vmatprep.mubr.f32.mxu0 %v31
    %238 = vmatmul.mubr.f32.gmra.mrb[0].mxu0 %v30
    %v239 = vpop.f32.mrb[0].mxu0
    %v240 = vadd.f32 %v171, %v239
    %v241 = vpop.f32.mrb[0].mxu0
    %242 = vdwg.mxu0
    %243 = vmatprep.subr.mxu0 0.0
    %244 = vmatpush1.msra.mxu0 %v70
    %245 = vmatprep.subr.mxu0 0.0
    %246 = vmatpush1.msra.mxu0 %v71
    %247 = vmatprep.subr.mxu0 0.0
    %248 = vmatpush1.msra.mxu0 %v72
    %249 = vmatprep.subr.mxu0 0.0
    %250 = vmatpush1.msra.mxu0 %v73
    %251 = vmatprep.subr.mxu0 0.0
    %252 = vmatpush1.msra.mxu0 %v74
    %253 = vmatprep.subr.mxu0 0.0
    %254 = vmatpush1.msra.mxu0 %v75
    %255 = vmatprep.subr.mxu0 0.0
    %256 = vmatpush1.msra.mxu0 %v76
    %257 = vmatprep.subr.mxu0 0.0
    %258 = vmatpush1.msra.mxu0 %v77
    %259 = vmatprep.subr.mxu0 0.0
    %260 = vmatpush1.msra.mxu0 %v78
    %261 = vmatprep.subr.mxu0 0.0
    %262 = vmatpush1.msra.mxu0 %v79
    %263 = vmatprep.subr.mxu0 0.0
    %264 = vmatpush1.msra.mxu0 %v80
    %265 = vmatprep.subr.mxu0 0.0
    %266 = vmatpush1.msra.mxu0 %v81
    %267 = vmatprep.subr.mxu0 0.0
    %268 = vmatpush1.msra.mxu0 %v82
    %269 = vmatprep.subr.mxu0 0.0
    %270 = vmatpush1.msra.mxu0 %v83
    %271 = vmatprep.subr.mxu0 0.0
    %272 = vmatpush1.msra.mxu0 %v84
    %273 = vmatprep.subr.mxu0 0.0
    %274 = vmatpush1.msra.mxu0 %v85
    %275 = vmatprep.subr.mxu0 0.0
    %276 = vmatpush1.msra.mxu0 %v86
    %277 = vmatprep.subr.mxu0 0.0
    %278 = vmatpush1.msra.mxu0 %v87
    %279 = vmatprep.subr.mxu0 0.0
    %280 = vmatpush1.msra.mxu0 %v88
    %281 = vmatprep.subr.mxu0 0.0
    %282 = vmatpush1.msra.mxu0 %v89
    %283 = vmatprep.subr.mxu0 0.0
    %284 = vmatpush1.msra.mxu0 %v90
    %285 = vmatprep.subr.mxu0 0.0
    %286 = vmatpush1.msra.mxu0 %v91
    %287 = vmatprep.subr.mxu0 0.0
    %288 = vmatpush1.msra.mxu0 %v92
    %289 = vmatprep.subr.mxu0 0.0
    %290 = vmatpush1.msra.mxu0 %v93
    %291 = vmatprep.subr.mxu0 0.0
    %292 = vmatpush1.msra.mxu0 %v94
    %293 = vmatprep.subr.mxu0 0.0
    %294 = vmatpush1.msra.mxu0 %v95
    %295 = vmatprep.subr.mxu0 0.0
    %296 = vmatpush1.msra.mxu0 %v96
    %297 = vmatprep.subr.mxu0 0.0
    %298 = vmatpush1.msra.mxu0 %v97
    %299 = vmatprep.subr.mxu0 0.0
    %300 = vmatpush1.msra.mxu0 %v98
    %301 = vmatprep.subr.mxu0 0.0
    %302 = vmatpush1.msra.mxu0 %v99
    %303 = vmatprep.subr.mxu0 0.0
    %304 = vmatpush1.msra.mxu0 %v100
    %305 = vmatprep.subr.mxu0 0.0
    %306 = vmatpush1.msra.mxu0 %v101
    %307 = vmatprep.mubr.f32.mxu0 %v33
    %308 = vmatmul.mubr.f32.gmra.mrb[0].mxu0 %v32
    %v309 = vpop.f32.mrb[0].mxu0
    %v310 = vadd.f32 %v240, %v309
    %v311 = vpop.f32.mrb[0].mxu0
    %312 = vdwg.mxu0
    %313 = vmatprep.subr.mxu0 0.0
    %314 = vmatpush1.msra.mxu0 %v102
    %315 = vmatprep.subr.mxu0 0.0
    %316 = vmatpush1.msra.mxu0 %v103
    %317 = vmatprep.subr.mxu0 0.0
    %318 = vmatpush1.msra.mxu0 %v104
    %319 = vmatprep.subr.mxu0 0.0
    %320 = vmatpush1.msra.mxu0 %v105
    %321 = vmatprep.subr.mxu0 0.0
    %322 = vmatpush1.msra.mxu0 %v106
    %323 = vmatprep.subr.mxu0 0.0
    %324 = vmatpush1.msra.mxu0 %v107
    %325 = vmatprep.subr.mxu0 0.0
    %326 = vmatpush1.msra.mxu0 %v108
    %327 = vmatprep.subr.mxu0 0.0
    %328 = vmatpush1.msra.mxu0 %v109
    %329 = vmatprep.subr.mxu0 0.0
    %330 = vmatpush1.msra.mxu0 %v110
    %331 = vmatprep.subr.mxu0 0.0
    %332 = vmatpush1.msra.mxu0 %v111
    %333 = vmatprep.subr.mxu0 0.0
    %334 = vmatpush1.msra.mxu0 %v112
    %335 = vmatprep.subr.mxu0 0.0
    %336 = vmatpush1.msra.mxu0 %v113
    %337 = vmatprep.subr.mxu0 0.0
    %338 = vmatpush1.msra.mxu0 %v114
    %339 = vmatprep.subr.mxu0 0.0
    %340 = vmatpush1.msra.mxu0 %v115
    %341 = vmatprep.subr.mxu0 0.0
    %342 = vmatpush1.msra.mxu0 %v116
    %343 = vmatprep.subr.mxu0 0.0
    %344 = vmatpush1.msra.mxu0 %v117
    %345 = vmatprep.subr.mxu0 0.0
    %346 = vmatpush1.msra.mxu0 %v118
    %347 = vmatprep.subr.mxu0 0.0
    %348 = vmatpush1.msra.mxu0 %v119
    %349 = vmatprep.subr.mxu0 0.0
    %350 = vmatpush1.msra.mxu0 %v120
    %351 = vmatprep.subr.mxu0 0.0
    %352 = vmatpush1.msra.mxu0 %v121
    %353 = vmatprep.subr.mxu0 0.0
    %354 = vmatpush1.msra.mxu0 %v122
    %355 = vmatprep.subr.mxu0 0.0
    %356 = vmatpush1.msra.mxu0 %v123
    %357 = vmatprep.subr.mxu0 0.0
    %358 = vmatpush1.msra.mxu0 %v124
    %359 = vmatprep.subr.mxu0 0.0
    %360 = vmatpush1.msra.mxu0 %v125
    %361 = vmatprep.subr.mxu0 0.0
    %362 = vmatpush1.msra.mxu0 %v126
    %363 = vmatprep.subr.mxu0 0.0
    %364 = vmatpush1.msra.mxu0 %v127
    %365 = vmatprep.subr.mxu0 0.0
    %366 = vmatpush1.msra.mxu0 %v128
    %367 = vmatprep.subr.mxu0 0.0
    %368 = vmatpush1.msra.mxu0 %v129
    %369 = vmatprep.subr.mxu0 0.0
    %370 = vmatpush1.msra.mxu0 %v130
    %371 = vmatprep.subr.mxu0 0.0
    %372 = vmatpush1.msra.mxu0 %v131
    %373 = vmatprep.subr.mxu0 0.0
    %374 = vmatpush1.msra.mxu0 %v132
    %375 = vmatprep.subr.mxu0 0.0
    %376 = vmatpush1.msra.mxu0 %v133
    %377 = vmatprep.mubr.f32.mxu0 %v35
    %378 = vmatmul.mubr.f32.gmra.mrb[0].mxu0 %v34
    %v379 = vpop.f32.mrb[0].mxu0
    %v380 = vadd.f32 %v310, %v379
    %v381 = vpop.f32.mrb[0].mxu0
    %382 = vdwg.mxu0
    %383 = vmatprep.subr.mxu0 0.0
    %384 = vmatpush1.msra.mxu0 %v134
    %385 = vmatprep.subr.mxu0 0.0
    %386 = vmatpush1.msra.mxu0 %v135
    %387 = vmatprep.subr.mxu0 0.0
    %388 = vmatpush1.msra.mxu0 %v136
    %389 = vmatprep.subr.mxu0 0.0
    %390 = vmatpush1.msra.mxu0 %v137
    %391 = vmatprep.subr.mxu0 0.0
    %392 = vmatpush1.msra.mxu0 %v138
    %393 = vmatprep.subr.mxu0 0.0
    %394 = vmatpush1.msra.mxu0 %v139
    %395 = vmatprep.subr.mxu0 0.0
    %396 = vmatpush1.msra.mxu0 %v140
    %397 = vmatprep.subr.mxu0 0.0
    %398 = vmatpush1.msra.mxu0 %v141
    %399 = vmatprep.subr.mxu0 0.0
    %400 = vmatpush1.msra.mxu0 %v142
    %401 = vmatprep.subr.mxu0 0.0
    %402 = vmatpush1.msra.mxu0 %v143
    %403 = vmatprep.subr.mxu0 0.0
    %404 = vmatpush1.msra.mxu0 %v144
    %405 = vmatprep.subr.mxu0 0.0
    %406 = vmatpush1.msra.mxu0 %v145
    %407 = vmatprep.subr.mxu0 0.0
    %408 = vmatpush1.msra.mxu0 %v146
    %409 = vmatprep.subr.mxu0 0.0
    %410 = vmatpush1.msra.mxu0 %v147
    %411 = vmatprep.subr.mxu0 0.0
    %412 = vmatpush1.msra.mxu0 %v148
    %413 = vmatprep.subr.mxu0 0.0
    %414 = vmatpush1.msra.mxu0 %v149
    %415 = vmatprep.subr.mxu0 0.0
    %416 = vmatpush1.msra.mxu0 %v150
    %417 = vmatprep.subr.mxu0 0.0
    %418 = vmatpush1.msra.mxu0 %v151
    %419 = vmatprep.subr.mxu0 0.0
    %420 = vmatpush1.msra.mxu0 %v152
    %421 = vmatprep.subr.mxu0 0.0
    %422 = vmatpush1.msra.mxu0 %v153
    %423 = vmatprep.subr.mxu0 0.0
    %424 = vmatpush1.msra.mxu0 %v154
    %425 = vmatprep.subr.mxu0 0.0
    %426 = vmatpush1.msra.mxu0 %v155
    %427 = vmatprep.subr.mxu0 0.0
    %428 = vmatpush1.msra.mxu0 %v156
    %429 = vmatprep.subr.mxu0 0.0
    %430 = vmatpush1.msra.mxu0 %v157
    %431 = vmatprep.subr.mxu0 0.0
    %432 = vmatpush1.msra.mxu0 %v158
    %433 = vmatprep.subr.mxu0 0.0
    %434 = vmatpush1.msra.mxu0 %v159
    %435 = vmatprep.subr.mxu0 0.0
    %436 = vmatpush1.msra.mxu0 %v160
    %437 = vmatprep.subr.mxu0 0.0
    %438 = vmatpush1.msra.mxu0 %v161
    %439 = vmatprep.subr.mxu0 0.0
    %440 = vmatpush1.msra.mxu0 %v162
    %441 = vmatprep.subr.mxu0 0.0
    %442 = vmatpush1.msra.mxu0 %v163
    %443 = vmatprep.subr.mxu0 0.0
    %444 = vmatpush1.msra.mxu0 %v164
    %445 = vmatprep.subr.mxu0 0.0
    %446 = vmatpush1.msra.mxu0 %v165
    %447 = vmatprep.mubr.f32.mxu0 %v37
    %448 = vmatmul.mubr.f32.gmra.mrb[0].mxu0 %v36
    %v449 = vpop.f32.mrb[0].mxu0
    %v450 = vadd.f32 %v380, %v449
    %v451 = vpop.f32.mrb[0].mxu0
    %452 = vdwg.mxu0
    %453 = vst [vmem:[%s3] sm:$0xff] %v450
    %454 = vmax.xlane.f32.xlu0 %v450
    %v455 = vpop.xlane.xlu0 %454
    %v456 = vsub.f32 %v450, %v455
    %v457 = vmul.f32 %v456, 1.442695
    %v458 = vpow.pop %v457
    %459 = vadd.xlane.f32.xlu0 %v458
    %v460 = vpop.xlane.xlu0 %459
    %v461 = vrcp.pop %v460
    %v462 = vmul.f32 %v458, %v461
    %463 = vst [vmem:[%s4] sm:$0xff] %v462
    // Predicated region
    $region18: #{linear_classifier_forward.1} parent=1 // pred_check
      _
    $region19: #{linear_classifier_forward.1} parent=1 // pred_check_branch
      %465 = sbr.rel (0) target = $region21
    $region20: #{linear_classifier_forward.1} parent=1 // pred_region
      _
    $region21: #{linear_classifier_forward.1} parent=1 // pred_fallthru
      _
    // Predicated region
    $region22: #{linear_classifier_forward.1} parent=1 // pred_check
      _
    $region23: #{linear_classifier_forward.1} parent=1 // pred_check_branch
      %467 = sbr.rel (0) target = $region25
    $region24: #{linear_classifier_forward.1} parent=1 // pred_region
      _
    $region25: #{linear_classifier_forward.1} parent=1 // pred_fallthru
      _
    // Predicated region
    $region26: #{linear_classifier_forward.1} parent=1 // pred_check
      _
    $region27: #{linear_classifier_forward.1} parent=1 // pred_check_branch
      %469 = sbr.rel (0) target = $region29
    $region28: #{linear_classifier_forward.1} parent=1 // pred_region
      _
    $region29: #{linear_classifier_forward.1} parent=1 // pred_fallthru
      _
    // Predicated region
    $region30: #{linear_classifier_forward.1} parent=1 // pred_check
      _
    $region31: #{linear_classifier_forward.1} parent=1 // pred_check_branch
      %471 = sbr.rel (0) target = $region33
    $region32: #{linear_classifier_forward.1} parent=1 // pred_region
      _
    $region33: #{linear_classifier_forward.1} parent=1 // pred_fallthru
      _
    %472 = vsyncpa [#allocation3], 1

</llo_original>
